<compile_context>
chip_gen: v5e
topology: v5e:2x2
jax: 0.10.0
libtpu: 0.0.40
codegen_flags: <defaults>
</compile_context>

<pallas_src>
import jax
import jax.numpy as jnp
import numpy as np
from jax.experimental import pallas as pl
from jax.experimental.pallas import tpu as pltpu


def _make_rnn_step_kernel(Bs, L, compute_dtype):
    """One grid step = one (batch-shard, timestep). Hidden carry in VMEM scratch."""

    def kernel(emb_ref, h0_ref, w0_ref, b0_ref, wrec0_ref, wsum_ref, brec_ref,
               hlast_ref, hfinal_ref, carry_ref):
        t = pl.program_id(1)

        # Load this shard's initial hidden state once, at t == 0.
        @pl.when(t == 0)
        def _():
            carry_ref[...] = h0_ref[...]

        x = emb_ref[...]                                     # (Bs, E), compute dtype
        h = carry_ref[...]                                   # (L*Bs, H), f32
        # dropout == identity (eval mode)

        # ---- layer 0 ------------------------------------------------------
        # rec_layers[0] acts on the whole flattened (L*Bs, H) hidden tensor;
        # regular_layers[0] acts on the (Bs, E) embedding and broadcasts over L.
        hid0 = jnp.dot(h.astype(compute_dtype), wrec0_ref[...],
                       preferred_element_type=jnp.float32) + brec_ref[0]   # (L*Bs, H)
        proj0 = jnp.dot(x, w0_ref[...],
                        preferred_element_type=jnp.float32) + b0_ref[...]  # (Bs, H)
        # Broadcast-add proj0 across the L layer copies via static slice stores
        # (avoids concatenate / reshape relayouts); tanh stays in f32.
        for l in range(L):
            carry_ref[l * Bs:(l + 1) * Bs, :] = jnp.tanh(
                hid0[l * Bs:(l + 1) * Bs, :] + proj0)
        h = carry_ref[...]                                   # (L*Bs, H), f32

        # ---- layers 1..L-1 (wreg + wrec fused into one weight) -------------
        # x == hidden_states here, so regular_layers[l](x) + rec_layers[l](h)
        # == x @ (wreg[l-1].T + wrec[l].T) + brec[l]  (W_sum precomputed).
        for l in range(1, L):
            h = jnp.tanh(jnp.dot(h.astype(compute_dtype), wsum_ref[l - 1],
                                 preferred_element_type=jnp.float32)
                         + brec_ref[l])
        carry_ref[...] = h

        # Stream out the last-layer hidden slice (decoded later in one GEMM).
        hlast_ref[...] = h[(L - 1) * Bs:, :].astype(compute_dtype)

        # Final hidden state, written once on the last timestep.
        @pl.when(t == pl.num_programs(1) - 1)
        def _():
            hfinal_ref[...] = h

    return kernel


def _decoder_kernel(h_ref, w_ref, b_ref, o_ref):
    # One MXU-saturating GEMM over all (seq*batch) rows.
    # TODO(synk): add a grid over rows/vocab when wdec + logits exceed VMEM.
    o_ref[...] = (jnp.dot(h_ref[...], w_ref[...],
                          preferred_element_type=jnp.float32)
                  + b_ref[...]).astype(o_ref.dtype)


def rnn_forward(inputs, hidden, params, *, param_dtype=jnp.float32,
                num_batch_shards=None):
    """inputs: (S, B) int tokens; hidden: (L, B, H). Returns (logits, h_final)."""
    S, B = inputs.shape
    L, _, H = hidden.shape
    V, E = params["emb"].shape

    # Batch split across TensorCores (v7x has 2 TCs; harmless elsewhere).
    if num_batch_shards is None:
        num_batch_shards = 2 if (B % 2 == 0) else 1
    nS = num_batch_shards
    assert B % nS == 0
    Bs = B // nS
    pbytes = np.dtype(param_dtype).itemsize

    # Embedding lookup as a plain gather outside the kernel (no one-hot matmul).
    emb_seq = jnp.take(params["emb"], inputs, axis=0).astype(param_dtype)   # (S,B,E)

    # Weight prep: (in, out) layout so the kernel computes x @ W + b.
    w0_t = params["w0"].T.astype(param_dtype)                               # (E,H)
    b0 = params["b0"].reshape(1, H).astype(jnp.float32)
    wrec0_t = params["wrec"][0].T.astype(param_dtype)                       # (H,H)
    if L > 1:
        wsum = (jnp.transpose(params["wreg"], (0, 2, 1))
                + jnp.transpose(params["wrec"][1:], (0, 2, 1))).astype(param_dtype)
    else:
        wsum = jnp.zeros((1, H, H), param_dtype)                            # unused
    Lw = wsum.shape[0]
    brec = params["brec"].reshape(L, 1, H).astype(jnp.float32)
    wdec_t = params["wdec"].T.astype(param_dtype)                           # (H,V)
    bdec = params["bdec"].reshape(1, V).astype(jnp.float32)

    # Shard layout: rows are [shard, layer*Bs + b].
    emb_sh = emb_seq.reshape(S, nS, Bs, E).transpose(1, 0, 2, 3)            # (nS,S,Bs,E)
    h0_sh = (hidden.astype(jnp.float32).reshape(L, nS, Bs, H)
             .transpose(1, 0, 2, 3).reshape(nS, L * Bs, H))                 # (nS,L*Bs,H)

    # Explicit VMEM budget: 2x (double-buffered) blocks + scratch + headroom.
    blk_in = (Bs * E * pbytes + L * Bs * H * 4 + E * H * pbytes + H * 4
              + H * H * pbytes + Lw * H * H * pbytes + L * H * 4)
    blk_out = Bs * H * pbytes + L * Bs * H * 4
    vmem_rnn = int(min(max(2 * (blk_in + blk_out) + L * Bs * H * 4 + (2 << 20),
                           4 << 20), 64 << 20))

    rnn_cost = pl.CostEstimate(
        flops=int(S * (L * 2 * (L * B) * H * H + 2 * B * E * H)),
        transcendentals=int(S * L * L * B * H),
        bytes_accessed=int(S * B * E * pbytes + L * B * H * 4
                           + (E * H + H * H + Lw * H * H) * pbytes
                           + (L * H + H) * 4
                           + S * B * H * pbytes + L * B * H * 4))

    kernel = _make_rnn_step_kernel(Bs, L, param_dtype)
    hlast_sh, hfinal_sh = pl.pallas_call(
        kernel,
        grid_spec=pltpu.PrefetchScalarGridSpec(
            num_scalar_prefetch=0,
            grid=(nS, S),
            in_specs=[
                pl.BlockSpec((None, None, Bs, E), lambda s, t: (s, t, 0, 0)),  # emb slice
                pl.BlockSpec((None, L * Bs, H), lambda s, t: (s, 0, 0)),       # h0 shard
                pl.BlockSpec((E, H), lambda s, t: (0, 0)),                     # w0
                pl.BlockSpec((1, H), lambda s, t: (0, 0)),                     # b0
                pl.BlockSpec((H, H), lambda s, t: (0, 0)),                     # wrec0
                pl.BlockSpec((Lw, H, H), lambda s, t: (0, 0, 0)),              # W_sum
                pl.BlockSpec((L, 1, H), lambda s, t: (0, 0, 0)),               # brec
            ],
            out_specs=(
                pl.BlockSpec((None, None, Bs, H), lambda s, t: (s, t, 0, 0)),  # h_last[t]
                pl.BlockSpec((None, L * Bs, H), lambda s, t: (s, 0, 0)),       # h_final
            ),
            scratch_shapes=[pltpu.VMEM((L * Bs, H), jnp.float32)],             # hidden carry
        ),
        out_shape=(jax.ShapeDtypeStruct((nS, S, Bs, H), param_dtype),
                   jax.ShapeDtypeStruct((nS, L * Bs, H), jnp.float32)),
        compiler_params=pltpu.CompilerParams(
            dimension_semantics=("parallel", "arbitrary"),
            vmem_limit_bytes=vmem_rnn),
        cost_estimate=rnn_cost,
    )(emb_sh, h0_sh, w0_t, b0, wrec0_t, wsum, brec)

    # Un-shard.
    h_last_seq = hlast_sh.transpose(1, 0, 2, 3).reshape(S, B, H)
    h_final = (hfinal_sh.reshape(nS, L, Bs, H).transpose(1, 0, 2, 3)
               .reshape(L, B, H))

    # Decoder: one (S*B, H) @ (H, V) GEMM instead of S skinny per-step matmuls.
    h_flat = h_last_seq.reshape(S * B, H)
    dec_bytes = S * B * H * pbytes + H * V * pbytes + V * 4 + S * B * V * 4
    vmem_dec = int(min(max(2 * dec_bytes + (2 << 20), 4 << 20), 64 << 20))
    logits_flat = pl.pallas_call(
        _decoder_kernel,
        out_shape=jax.ShapeDtypeStruct((S * B, V), jnp.float32),
        compiler_params=pltpu.CompilerParams(vmem_limit_bytes=vmem_dec),
        cost_estimate=pl.CostEstimate(flops=int(2 * S * B * H * V),
                                      transcendentals=0,
                                      bytes_accessed=int(dec_bytes)),
    )(h_flat, wdec_t, bdec)
    logits = logits_flat.reshape(S, B, V)
    return logits, h_final


def reference_jax(inputs, hidden, params):
    """Pure-JAX mirror of the PyTorch forward (eval mode), incl. its quirks."""
    S, _ = inputs.shape
    L = hidden.shape[0]
    emb = params["emb"][inputs]                       # (S, B, E)
    h = hidden
    logits = []
    for t in range(S):
        x = emb[t]                                    # (B, E)
        for l in range(L):
            hid_temp = h @ params["wrec"][l].T + params["brec"][l]   # (L, B, H)
            if l == 0:
                proj = x @ params["w0"].T + params["b0"]             # (B, H)
            else:
                proj = x @ params["wreg"][l - 1].T                   # (L, B, H)
            x = jnp.tanh(proj + hid_temp)                            # (L, B, H)
            h = x
        z = x @ params["wdec"].T + params["bdec"]                    # (L, B, V)
        logits.append(z[L - 1])                                      # (B, V)
    return jnp.stack(logits, axis=0), h


if __name__ == "__main__":
    seq_len, batch_size = 8, 2
    emb_size, hidden_size, vocab_size, num_layers = 32, 32, 64, 3

    key = jax.random.PRNGKey(0)
    ks = jax.random.split(key, 10)
    k = float(np.sqrt(1.0 / hidden_size))

    def uni(kk, shape, a):
        return jax.random.uniform(kk, shape, jnp.float32, minval=-a, maxval=a)

    params = {
        "emb":  uni(ks[0], (vocab_size, emb_size), 0.1),                     # encoder.weight
        "w0":   uni(ks[1], (hidden_size, emb_size), k),                      # regular_layers[0].weight
        "b0":   uni(ks[2], (hidden_size,), k),                               # regular_layers[0].bias
        "wreg": uni(ks[3], (num_layers - 1, hidden_size, hidden_size), k),   # regular_layers[1:] (no bias)
        "wrec": uni(ks[4], (num_layers, hidden_size, hidden_size), k),       # rec_layers[l].weight
        "brec": uni(ks[5], (num_layers, hidden_size), k),                    # rec_layers[l].bias
        "wdec": uni(ks[6], (vocab_size, hidden_size), 0.1),                  # decoder.weight
        "bdec": jnp.zeros((vocab_size,), jnp.float32),                       # decoder.bias (init 0)
    }

    inputs = jax.random.randint(ks[7], (seq_len, batch_size), 0, vocab_size)
    hidden0 = uni(ks[8], (num_layers, batch_size, hidden_size), 0.5)

    ref_logits, ref_h = reference_jax(inputs, hidden0, params)

    # f32 path: strict check against the reference.
    logits, h_final = rnn_forward(inputs, hidden0, params, param_dtype=jnp.float32)
    (logits, h_final) = jax.block_until_ready((logits, h_final))
    np.testing.assert_allclose(np.asarray(logits), np.asarray(ref_logits),
                               rtol=1e-4, atol=1e-5)
    np.testing.assert_allclose(np.asarray(h_final), np.asarray(ref_h),
                               rtol=1e-4, atol=1e-5)

    # bf16 weights/activations (f32 accumulation + f32 tanh): loose sanity check.
    logits_bf, h_final_bf = rnn_forward(inputs, hidden0, params,
                                        param_dtype=jnp.bfloat16)
    (logits_bf, h_final_bf) = jax.block_until_ready((logits_bf, h_final_bf))
    np.testing.assert_allclose(np.asarray(logits_bf), np.asarray(ref_logits),
                               rtol=1e-1, atol=1e-1)
    np.testing.assert_allclose(np.asarray(h_final_bf), np.asarray(ref_h),
                               rtol=1e-1, atol=1e-1)

    print("KERNEL_OK")
</pallas_src>

<mosaic_0001>
module attributes {stable_mosaic.version = 11 : i64} {
  func.func @kernel(%arg0: i32, %arg1: i32, %arg2: memref<1x1x1x32xf32, #tpu.memory_space<vmem>>, %arg3: memref<1x3x32xf32, #tpu.memory_space<vmem>>, %arg4: memref<32x32xf32, #tpu.memory_space<vmem>>, %arg5: memref<1x32xf32, #tpu.memory_space<vmem>>, %arg6: memref<32x32xf32, #tpu.memory_space<vmem>>, %arg7: memref<2x32x32xf32, #tpu.memory_space<vmem>>, %arg8: memref<3x1x32xf32, #tpu.memory_space<vmem>>, %arg9: memref<1x1x1x32xf32, #tpu.memory_space<vmem>>, %arg10: memref<1x3x32xf32, #tpu.memory_space<vmem>>, %arg11: memref<3x32xf32, #tpu.memory_space<vmem>>) attributes {dimension_semantics = [#tpu.dimension_semantics<parallel>, #tpu.dimension_semantics<arbitrary>], iteration_bounds = array<i64: 2, 8>, scalar_prefetch = 0 : i64, scratch_operands = 1 : i64, tpu.core_type = #tpu.core_type<tc>, window_params = [{transform_indices = @transform_0, window_bounds = array<i64: 1, 1, 1, 32>}, {transform_indices = @transform_1, window_bounds = array<i64: 1, 3, 32>}, {pipeline_mode = #tpu.pipeline_mode<synchronous>, transform_indices = @transform_2, window_bounds = array<i64: 32, 32>}, {pipeline_mode = #tpu.pipeline_mode<synchronous>, transform_indices = @transform_3, window_bounds = array<i64: 1, 32>}, {pipeline_mode = #tpu.pipeline_mode<synchronous>, transform_indices = @transform_4, window_bounds = array<i64: 32, 32>}, {pipeline_mode = #tpu.pipeline_mode<synchronous>, transform_indices = @transform_5, window_bounds = array<i64: 2, 32, 32>}, {pipeline_mode = #tpu.pipeline_mode<synchronous>, transform_indices = @transform_6, window_bounds = array<i64: 3, 1, 32>}, {transform_indices = @transform_7, window_bounds = array<i64: 1, 1, 1, 32>}, {transform_indices = @transform_8, window_bounds = array<i64: 1, 3, 32>}]} {
    %c0_i32 = arith.constant 0 : i32
    %0 = arith.cmpi eq, %arg1, %c0_i32 : i32
    %1 = arith.extui %0 : i1 to i32
    %c0_i32_0 = arith.constant 0 : i32
    %2 = arith.cmpi ne, %1, %c0_i32_0 : i32
    scf.if %2 {
      %c0_43 = arith.constant 0 : index
      %c0_44 = arith.constant 0 : index
      %c0_45 = arith.constant 0 : index
      %53 = vector.load %arg3[%c0_43, %c0_44, %c0_45] : memref<1x3x32xf32, #tpu.memory_space<vmem>>, vector<1x3x32xf32>
      %54 = vector.shape_cast %53 : vector<1x3x32xf32> to vector<3x32xf32>
      %c0_46 = arith.constant 0 : index
      %c0_47 = arith.constant 0 : index
      %55 = vector.load %arg11[%c0_46, %c0_47] : memref<3x32xf32, #tpu.memory_space<vmem>>, vector<3x32xf32>
      tpu.vector_store %arg11[%c0_46, %c0_47], %54 {strides = array<i32>} : memref<3x32xf32, #tpu.memory_space<vmem>>, vector<3x32xf32>,
    } else {
    }
    %c0 = arith.constant 0 : index
    %c0_1 = arith.constant 0 : index
    %c0_2 = arith.constant 0 : index
    %c0_3 = arith.constant 0 : index
    %3 = vector.load %arg2[%c0, %c0_1, %c0_2, %c0_3] : memref<1x1x1x32xf32, #tpu.memory_space<vmem>>, vector<1x1x1x32xf32>
    %4 = vector.shape_cast %3 : vector<1x1x1x32xf32> to vector<1x32xf32>
    %c0_4 = arith.constant 0 : index
    %c0_5 = arith.constant 0 : index
    %5 = vector.load %arg11[%c0_4, %c0_5] : memref<3x32xf32, #tpu.memory_space<vmem>>, vector<3x32xf32>
    %c0_6 = arith.constant 0 : index
    %c0_7 = arith.constant 0 : index
    %6 = vector.load %arg6[%c0_6, %c0_7] : memref<32x32xf32, #tpu.memory_space<vmem>>, vector<32x32xf32>
    %cst = arith.constant dense<0.000000e+00> : vector<3x32xf32>
    %7 = tpu.matmul %5, %6, %cst {dimension_numbers = #tpu.dot_dimension_numbers<[1], [0], [0], [1], [0, 0, 1, 1], [], []>} : vector<3x32xf32>, vector<32x32xf32>, vector<3x32xf32> -> vector<3x32xf32>
    %c0_8 = arith.constant 0 : index
    %c0_9 = arith.constant 0 : index
    %c0_10 = arith.constant 0 : index
    %8 = vector.load %arg8[%c0_8, %c0_9, %c0_10] : memref<3x1x32xf32, #tpu.memory_space<vmem>>, vector<1x1x32xf32>
    %9 = vector.shape_cast %8 : vector<1x1x32xf32> to vector<1x32xf32>
    %10 = vector.broadcast %9 : vector<1x32xf32> to vector<3x32xf32>
    %11 = arith.addf %7, %10 : vector<3x32xf32>
    %c0_11 = arith.constant 0 : index
    %c0_12 = arith.constant 0 : index
    %12 = vector.load %arg4[%c0_11, %c0_12] : memref<32x32xf32, #tpu.memory_space<vmem>>, vector<32x32xf32>
    %cst_13 = arith.constant dense<0.000000e+00> : vector<1x32xf32>
    %13 = tpu.matmul %4, %12, %cst_13 {dimension_numbers = #tpu.dot_dimension_numbers<[1], [0], [0], [1], [0, 0, 1, 1], [], []>} : vector<1x32xf32>, vector<32x32xf32>, vector<1x32xf32> -> vector<1x32xf32>
    %c0_14 = arith.constant 0 : index
    %c0_15 = arith.constant 0 : index
    %14 = vector.load %arg5[%c0_14, %c0_15] : memref<1x32xf32, #tpu.memory_space<vmem>>, vector<1x32xf32>
    %15 = arith.addf %13, %14 : vector<1x32xf32>
    %16 = vector.extract_strided_slice %11 {offsets = [0, 0], sizes = [1, 32], strides = [1, 1]} : vector<3x32xf32> to vector<1x32xf32>
    %17 = arith.addf %16, %15 : vector<1x32xf32>
    %18 = math.tanh %17 : vector<1x32xf32>
    %c0_16 = arith.constant 0 : index
    %c0_17 = arith.constant 0 : index
    %19 = vector.load %arg11[%c0_16, %c0_17] : memref<3x32xf32, #tpu.memory_space<vmem>>, vector<1x32xf32>
    tpu.vector_store %arg11[%c0_16, %c0_17], %18 {strides = array<i32>} : memref<3x32xf32, #tpu.memory_space<vmem>>, vector<1x32xf32>,
    %20 = vector.extract_strided_slice %11 {offsets = [1, 0], sizes = [1, 32], strides = [1, 1]} : vector<3x32xf32> to vector<1x32xf32>
    %21 = arith.addf %20, %15 : vector<1x32xf32>
    %22 = math.tanh %21 : vector<1x32xf32>
    %c1 = arith.constant 1 : index
    %c0_18 = arith.constant 0 : index
    %23 = vector.load %arg11[%c1, %c0_18] : memref<3x32xf32, #tpu.memory_space<vmem>>, vector<1x32xf32>
    tpu.vector_store %arg11[%c1, %c0_18], %22 {strides = array<i32>} : memref<3x32xf32, #tpu.memory_space<vmem>>, vector<1x32xf32>,
    %24 = vector.extract_strided_slice %11 {offsets = [2, 0], sizes = [1, 32], strides = [1, 1]} : vector<3x32xf32> to vector<1x32xf32>
    %25 = arith.addf %24, %15 : vector<1x32xf32>
    %26 = math.tanh %25 : vector<1x32xf32>
    %c2 = arith.constant 2 : index
    %c0_19 = arith.constant 0 : index
    %27 = vector.load %arg11[%c2, %c0_19] : memref<3x32xf32, #tpu.memory_space<vmem>>, vector<1x32xf32>
    tpu.vector_store %arg11[%c2, %c0_19], %26 {strides = array<i32>} : memref<3x32xf32, #tpu.memory_space<vmem>>, vector<1x32xf32>,
    %c0_20 = arith.constant 0 : index
    %c0_21 = arith.constant 0 : index
    %28 = vector.load %arg11[%c0_20, %c0_21] : memref<3x32xf32, #tpu.memory_space<vmem>>, vector<3x32xf32>
    %c0_22 = arith.constant 0 : index
    %c0_23 = arith.constant 0 : index
    %c0_24 = arith.constant 0 : index
    %29 = vector.load %arg7[%c0_22, %c0_23, %c0_24] : memref<2x32x32xf32, #tpu.memory_space<vmem>>, vector<1x32x32xf32>
    %30 = vector.shape_cast %29 : vector<1x32x32xf32> to vector<32x32xf32>
    %cst_25 = arith.constant dense<0.000000e+00> : vector<3x32xf32>
    %31 = tpu.matmul %28, %30, %cst_25 {dimension_numbers = #tpu.dot_dimension_numbers<[1], [0], [0], [1], [0, 0, 1, 1], [], []>} : vector<3x32xf32>, vector<32x32xf32>, vector<3x32xf32> -> vector<3x32xf32>
    %c1_26 = arith.constant 1 : index
    %c0_27 = arith.constant 0 : index
    %c0_28 = arith.constant 0 : index
    %32 = vector.load %arg8[%c1_26, %c0_27, %c0_28] : memref<3x1x32xf32, #tpu.memory_space<vmem>>, vector<1x1x32xf32>
    %33 = vector.shape_cast %32 : vector<1x1x32xf32> to vector<1x32xf32>
    %34 = vector.broadcast %33 : vector<1x32xf32> to vector<3x32xf32>
    %35 = arith.addf %31, %34 : vector<3x32xf32>
    %36 = math.tanh %35 : vector<3x32xf32>
    %c1_29 = arith.constant 1 : index
    %c0_30 = arith.constant 0 : index
    %c0_31 = arith.constant 0 : index
    %37 = vector.load %arg7[%c1_29, %c0_30, %c0_31] : memref<2x32x32xf32, #tpu.memory_space<vmem>>, vector<1x32x32xf32>
    %38 = vector.shape_cast %37 : vector<1x32x32xf32> to vector<32x32xf32>
    %cst_32 = arith.constant dense<0.000000e+00> : vector<3x32xf32>
    %39 = tpu.matmul %36, %38, %cst_32 {dimension_numbers = #tpu.dot_dimension_numbers<[1], [0], [0], [1], [0, 0, 1, 1], [], []>} : vector<3x32xf32>, vector<32x32xf32>, vector<3x32xf32> -> vector<3x32xf32>
    %c2_33 = arith.constant 2 : index
    %c0_34 = arith.constant 0 : index
    %c0_35 = arith.constant 0 : index
    %40 = vector.load %arg8[%c2_33, %c0_34, %c0_35] : memref<3x1x32xf32, #tpu.memory_space<vmem>>, vector<1x1x32xf32>
    %41 = vector.shape_cast %40 : vector<1x1x32xf32> to vector<1x32xf32>
    %42 = vector.broadcast %41 : vector<1x32xf32> to vector<3x32xf32>
    %43 = arith.addf %39, %42 : vector<3x32xf32>
    %44 = math.tanh %43 : vector<3x32xf32>
    %c0_36 = arith.constant 0 : index
    %c0_37 = arith.constant 0 : index
    %45 = vector.load %arg11[%c0_36, %c0_37] : memref<3x32xf32, #tpu.memory_space<vmem>>, vector<3x32xf32>
    tpu.vector_store %arg11[%c0_36, %c0_37], %44 {strides = array<i32>} : memref<3x32xf32, #tpu.memory_space<vmem>>, vector<3x32xf32>,
    %46 = vector.extract_strided_slice %44 {offsets = [2, 0], sizes = [1, 32], strides = [1, 1]} : vector<3x32xf32> to vector<1x32xf32>
    %c0_38 = arith.constant 0 : index
    %c0_39 = arith.constant 0 : index
    %c0_40 = arith.constant 0 : index
    %c0_41 = arith.constant 0 : index
    %47 = vector.load %arg9[%c0_38, %c0_39, %c0_40, %c0_41] : memref<1x1x1x32xf32, #tpu.memory_space<vmem>>, vector<1x1x1x32xf32>
    %48 = vector.shape_cast %47 : vector<1x1x1x32xf32> to vector<1x32xf32>
    %49 = vector.shape_cast %46 : vector<1x32xf32> to vector<1x1x1x32xf32>
    tpu.vector_store %arg9[%c0_38, %c0_39, %c0_40, %c0_41], %49 {strides = array<i32>} : memref<1x1x1x32xf32, #tpu.memory_space<vmem>>, vector<1x1x1x32xf32>,
    %c7_i32 = arith.constant 7 : i32
    %50 = arith.cmpi eq, %arg1, %c7_i32 : i32
    %51 = arith.extui %50 : i1 to i32
    %c0_i32_42 = arith.constant 0 : i32
    %52 = arith.cmpi ne, %51, %c0_i32_42 : i32
    scf.if %52 {
      %c0_43 = arith.constant 0 : index
      %c0_44 = arith.constant 0 : index
      %c0_45 = arith.constant 0 : index
      %53 = vector.load %arg10[%c0_43, %c0_44, %c0_45] : memref<1x3x32xf32, #tpu.memory_space<vmem>>, vector<1x3x32xf32>
      %54 = vector.shape_cast %53 : vector<1x3x32xf32> to vector<3x32xf32>
      %55 = vector.shape_cast %44 : vector<3x32xf32> to vector<1x3x32xf32>
      tpu.vector_store %arg10[%c0_43, %c0_44, %c0_45], %55 {strides = array<i32>} : memref<1x3x32xf32, #tpu.memory_space<vmem>>, vector<1x3x32xf32>,
    } else {
    }
    return
  }
  func.func @transform_0(%arg0: i32, %arg1: i32) -> (i32, i32, i32, i32) {
    %c0_i32 = arith.constant 0 : i32
    %c0_i32_0 = arith.constant 0 : i32
    %c0_i32_1 = arith.constant 0 : i32
    return %arg0, %arg1, %c0_i32, %c0_i32_0 : i32, i32, i32, i32
  }
  func.func @transform_1(%arg0: i32, %arg1: i32) -> (i32, i32, i32) {
    %c0_i32 = arith.constant 0 : i32
    %c0_i32_0 = arith.constant 0 : i32
    %c0_i32_1 = arith.constant 0 : i32
    return %arg0, %c0_i32, %c0_i32_0 : i32, i32, i32
  }
  func.func @transform_2(%arg0: i32, %arg1: i32) -> (i32, i32) {
    %c0_i32 = arith.constant 0 : i32
    %c0_i32_0 = arith.constant 0 : i32
    %c0_i32_1 = arith.constant 0 : i32
    return %c0_i32, %c0_i32_0 : i32, i32
  }
  func.func @transform_3(%arg0: i32, %arg1: i32) -> (i32, i32) {
    %c0_i32 = arith.constant 0 : i32
    %c0_i32_0 = arith.constant 0 : i32
    %c0_i32_1 = arith.constant 0 : i32
    return %c0_i32, %c0_i32_0 : i32, i32
  }
  func.func @transform_4(%arg0: i32, %arg1: i32) -> (i32, i32) {
    %c0_i32 = arith.constant 0 : i32
    %c0_i32_0 = arith.constant 0 : i32
    %c0_i32_1 = arith.constant 0 : i32
    return %c0_i32, %c0_i32_0 : i32, i32
  }
  func.func @transform_5(%arg0: i32, %arg1: i32) -> (i32, i32, i32) {
    %c0_i32 = arith.constant 0 : i32
    %c0_i32_0 = arith.constant 0 : i32
    %c0_i32_1 = arith.constant 0 : i32
    %c0_i32_2 = arith.constant 0 : i32
    return %c0_i32, %c0_i32_0, %c0_i32_1 : i32, i32, i32
  }
  func.func @transform_6(%arg0: i32, %arg1: i32) -> (i32, i32, i32) {
    %c0_i32 = arith.constant 0 : i32
    %c0_i32_0 = arith.constant 0 : i32
    %c0_i32_1 = arith.constant 0 : i32
    %c0_i32_2 = arith.constant 0 : i32
    return %c0_i32, %c0_i32_0, %c0_i32_1 : i32, i32, i32
  }
  func.func @transform_7(%arg0: i32, %arg1: i32) -> (i32, i32, i32, i32) {
    %c0_i32 = arith.constant 0 : i32
    %c0_i32_0 = arith.constant 0 : i32
    %c0_i32_1 = arith.constant 0 : i32
    return %arg0, %arg1, %c0_i32, %c0_i32_0 : i32, i32, i32, i32
  }
  func.func @transform_8(%arg0: i32, %arg1: i32) -> (i32, i32, i32) {
    %c0_i32 = arith.constant 0 : i32
    %c0_i32_0 = arith.constant 0 : i32
    %c0_i32_1 = arith.constant 0 : i32
    return %arg0, %c0_i32, %c0_i32_0 : i32, i32, i32
  }
}

</mosaic_0001>

<llo_original>
// kernel: tpu_custom_call.1
$region0: #{tpu_custom_call.1}
  #allocation0 [shape = 'u32[]', space=smem, size = 0x4, offset = 0x4, fixed_abs, tag = 'smem constant byte address 0x4 - core index']
  #allocation1 [shape = 'u32[72,128]{1,0:T(1,128)}', space=vmem, size = 0x9000, scoped, tag = 'internal scratch']
  #allocation2 [shape = 'f32[3,32]{1,0:T(4,128)}', space=vmem, size = 0x800, scoped, tag = 'scratch operand']
  %s0 = inlined_call_operand.hbm [shape: f32[2,8,1,32], index: 0, kind: input, shape index: {}]
  %s1 = inlined_call_operand.vmem [shape: f32[2,3,32], index: 1, kind: input, shape index: {}]
  %s2 = inlined_call_operand.hbm [shape: f32[32,32], index: 2, kind: input, shape index: {}]
  %s3 = inlined_call_operand.vmem [shape: f32[1,32], index: 3, kind: input, shape index: {}]
  %s4 = inlined_call_operand.hbm [shape: f32[32,32], index: 4, kind: input, shape index: {}]
  %s5 = inlined_call_operand.hbm [shape: f32[2,32,32], index: 5, kind: input, shape index: {}]
  %s6 = inlined_call_operand.vmem [shape: f32[3,1,32], index: 6, kind: input, shape index: {}]
  %s7 = inlined_call_operand.hbm [shape: f32[2,8,1,32], index: 7, kind: output, shape index: {0}]
  %s8 = inlined_call_operand.vmem [shape: f32[2,3,32], index: 8, kind: output, shape index: {1}]
  %9 = xla_tuple %s7, %s8
  %s10 = sld [smem:[#allocation0]]
  $region93: #{tpu_custom_call.1} parent=0
    _
  %s12 = ssub.s32 1, %s10
  %s13 = scalar_select 0, %s12, %s10
  $region1: #{tpu_custom_call.1} parent=0
    #allocation3 [shape = 'u8[1024]{0}', space=vmem, size = 0x400, scoped, tag = 'input window, operand 0']
    #allocation4 [shape = 's32[2]{0}', space=sflag, size = 0x8, scoped, tag = 'scoped memory for tpu_custom_call.1']
    #allocation5 [shape = 's32[2]{0}', space=sflag, size = 0x8, scoped, tag = 'scoped memory for tpu_custom_call.1']
    #allocation6 [shape = 'u8[16384]{0}', space=vmem, size = 0x4000, scoped, tag = 'input window, operand 2, single buffered']
    #allocation7 [shape = 's32[1]{0}', space=sflag, size = 0x4, scoped, tag = 'scoped memory for tpu_custom_call.1']
    #allocation8 [shape = 'u8[16384]{0}', space=vmem, size = 0x4000, scoped, tag = 'input window, operand 4, single buffered']
    #allocation9 [shape = 'u8[32768]{0}', space=vmem, size = 0x8000, scoped, tag = 'input window, operand 5, single buffered']
    #allocation10 [shape = 's32[1]{0}', space=sflag, size = 0x4, scoped, tag = 'scoped memory for tpu_custom_call.1']
    #allocation11 [shape = 'u8[1024]{0}', space=vmem, size = 0x400, scoped, tag = 'output window, operand 0']
    %14 = vsyncpa [#allocation4], 0
    %s15 = scalar_lea.sflag [#allocation4], 1
    %16 = vsyncpa %s15, 0
    %17 = vsyncpa [#allocation7], 0
    %18 = vsyncpa [#allocation10], 0
    %19 = vsyncpa [#allocation5], 0
    %s20 = scalar_lea.sflag [#allocation5], 1
    %21 = vsyncpa %s20, 0
    loop: start=0, step=1, limit=18
    $region2: #{tpu_custom_call.1} parent=1 // loop_pre_header
      _
    $region3: #{tpu_custom_call.1} parent=1 // loop_header
      %s23 = sphi 0, %s27
      %p24 = scmp.ge.s32.totalorder %s23, 18
      %s30 = sphi 0, %s42
      %s31 = sphi 0, %s38
      %s32 = sphi 0, %s30
      %s33 = sphi 0, %s31
      %s34 = sphi 0, %s32
      %s35 = sphi 0, %s33
      %s47 = sphi 0, %s49
      %s50 = sphi 0, %s47
      %s51 = sphi 0, %s50
      %s67 = sphi 0, %s51
      %s73 = sphi 0, %s75
      %s76 = sphi 0, %s73
      %s77 = sphi 0, %s76
      %s93 = sphi 0, %s77
      %s97 = sphi 0, %s97
      %s99 = sphi 0, %s97
      %s100 = sphi 0, %s99
      %s114 = sphi 0, %s100
      %s118 = sphi 0, %s118
      %s120 = sphi 0, %s118
      %s121 = sphi 0, %s120
      %s135 = sphi 0, %s121
      %s139 = sphi 0, %s139
      %s141 = sphi 0, %s139
      %s142 = sphi 0, %s141
      %s156 = sphi 0, %s142
      %s160 = sphi 0, %s160
      %s162 = sphi 0, %s160
      %s163 = sphi 0, %s162
      %s177 = sphi 0, %s163
      %s181 = sphi 0, %s181
      %s183 = sphi 0, %s181
      %s184 = sphi 0, %s183
      %s198 = sphi 0, %s184
      %s206 = sphi 0, %s208
      %s209 = sphi 0, %s206
      %s210 = sphi 0, %s209
      %s226 = sphi 0, %s210
      %s232 = sphi 0, %s234
      %s235 = sphi 0, %s232
      %s236 = sphi 0, %s235
      %s252 = sphi 0, %s236
    $region4: #{tpu_custom_call.1} parent=1 // loop_header_branch
      %26 = sbr.rel (%p24) target = $region8
    $region5: #{tpu_custom_call.1} parent=1 // loop_body
      %s28 = ssub.s32 %s23, 1
      %s29 = ssub.s32 %s23, 2
      %s36 = sadd.s32 1, %s31
      %p37 = scmp.ge.s32.totalorder %s36, 8
      %s38 = scalar_select %p37, 0, %s36
      %s39 = sadd.s32 1, %s30
      %s40 = scalar_select %p37, %s39, %s30
      %p41 = scmp.ge.s32.totalorder %s40, 2
      %s42 = scalar_select %p41, 0, %s40
      %s43 = ssub.s32 %s30, %s42
      %s44 = ssub.s32 %s31, %s38
      %s45 = sor.u32 %s43, %s44
      %p46 = scmp.eq.s32.totalorder %s45, 0
      %s48 = sadd.s32 %s47, 1
      %s49 = scalar_select %p46, %s47, %s48
      %p52 = pneg %p46
      %p53 = scmp.eq.s32.totalorder %s23, 15
      %p54 = por %p52, %p53
      %p55 = scmp.ne.s32.totalorder %s47, %s50
      %p56 = scmp.eq.s32.totalorder %s23, 0
      %p57 = por %p55, %p56
      %p58 = scmp.ne.s32.totalorder %s47, %s50
      %p59 = scmp.eq.s32.totalorder %s28, 15
      %p60 = por %p58, %p59
      %p61 = scmp.ne.s32.totalorder %s50, %s51
      %p62 = scmp.eq.s32.totalorder %s28, 0
      %p63 = por %p61, %p62
      %p64 = scmp.ne.s32.totalorder %s50, %s51
      %p65 = scmp.eq.s32.totalorder %s29, 15
      %p66 = por %p64, %p65
      %p68 = scmp.ne.s32.totalorder %s51, %s67
      %p69 = scmp.eq.s32.totalorder %s29, 0
      %p70 = por %p68, %p69
      %s71 = ssub.s32 %s30, %s42
      %p72 = scmp.eq.s32.totalorder %s71, 0
      %s74 = sadd.s32 %s73, 1
      %s75 = scalar_select %p72, %s73, %s74
      %p78 = pneg %p72
      %p79 = scmp.eq.s32.totalorder %s23, 15
      %p80 = por %p78, %p79
      %p81 = scmp.ne.s32.totalorder %s73, %s76
      %p82 = scmp.eq.s32.totalorder %s23, 0
      %p83 = por %p81, %p82
      %p84 = scmp.ne.s32.totalorder %s73, %s76
      %p85 = scmp.eq.s32.totalorder %s28, 15
      %p86 = por %p84, %p85
      %p87 = scmp.ne.s32.totalorder %s76, %s77
      %p88 = scmp.eq.s32.totalorder %s28, 0
      %p89 = por %p87, %p88
      %p90 = scmp.ne.s32.totalorder %s76, %s77
      %p91 = scmp.eq.s32.totalorder %s29, 15
      %p92 = por %p90, %p91
      %p94 = scmp.ne.s32.totalorder %s77, %s93
      %p95 = scmp.eq.s32.totalorder %s29, 0
      %p96 = por %p94, %p95
      %s98 = sadd.s32 %s97, 1
      %p101 = scmp.eq.s32.totalorder %s23, 15
      %p102 = scmp.ne.s32.totalorder %s97, %s99
      %p103 = scmp.eq.s32.totalorder %s23, 0
      %p104 = por %p102, %p103
      %p105 = scmp.ne.s32.totalorder %s97, %s99
      %p106 = scmp.eq.s32.totalorder %s28, 15
      %p107 = por %p105, %p106
      %p108 = scmp.ne.s32.totalorder %s99, %s100
      %p109 = scmp.eq.s32.totalorder %s28, 0
      %p110 = por %p108, %p109
      %p111 = scmp.ne.s32.totalorder %s99, %s100
      %p112 = scmp.eq.s32.totalorder %s29, 15
      %p113 = por %p111, %p112
      %p115 = scmp.ne.s32.totalorder %s100, %s114
      %p116 = scmp.eq.s32.totalorder %s29, 0
      %p117 = por %p115, %p116
      %s119 = sadd.s32 %s118, 1
      %p122 = scmp.eq.s32.totalorder %s23, 15
      %p123 = scmp.ne.s32.totalorder %s118, %s120
      %p124 = scmp.eq.s32.totalorder %s23, 0
      %p125 = por %p123, %p124
      %p126 = scmp.ne.s32.totalorder %s118, %s120
      %p127 = scmp.eq.s32.totalorder %s28, 15
      %p128 = por %p126, %p127
      %p129 = scmp.ne.s32.totalorder %s120, %s121
      %p130 = scmp.eq.s32.totalorder %s28, 0
      %p131 = por %p129, %p130
      %p132 = scmp.ne.s32.totalorder %s120, %s121
      %p133 = scmp.eq.s32.totalorder %s29, 15
      %p134 = por %p132, %p133
      %p136 = scmp.ne.s32.totalorder %s121, %s135
      %p137 = scmp.eq.s32.totalorder %s29, 0
      %p138 = por %p136, %p137
      %s140 = sadd.s32 %s139, 1
      %p143 = scmp.eq.s32.totalorder %s23, 15
      %p144 = scmp.ne.s32.totalorder %s139, %s141
      %p145 = scmp.eq.s32.totalorder %s23, 0
      %p146 = por %p144, %p145
      %p147 = scmp.ne.s32.totalorder %s139, %s141
      %p148 = scmp.eq.s32.totalorder %s28, 15
      %p149 = por %p147, %p148
      %p150 = scmp.ne.s32.totalorder %s141, %s142
      %p151 = scmp.eq.s32.totalorder %s28, 0
      %p152 = por %p150, %p151
      %p153 = scmp.ne.s32.totalorder %s141, %s142
      %p154 = scmp.eq.s32.totalorder %s29, 15
      %p155 = por %p153, %p154
      %p157 = scmp.ne.s32.totalorder %s142, %s156
      %p158 = scmp.eq.s32.totalorder %s29, 0
      %p159 = por %p157, %p158
      %s161 = sadd.s32 %s160, 1
      %p164 = scmp.eq.s32.totalorder %s23, 15
      %p165 = scmp.ne.s32.totalorder %s160, %s162
      %p166 = scmp.eq.s32.totalorder %s23, 0
      %p167 = por %p165, %p166
      %p168 = scmp.ne.s32.totalorder %s160, %s162
      %p169 = scmp.eq.s32.totalorder %s28, 15
      %p170 = por %p168, %p169
      %p171 = scmp.ne.s32.totalorder %s162, %s163
      %p172 = scmp.eq.s32.totalorder %s28, 0
      %p173 = por %p171, %p172
      %p174 = scmp.ne.s32.totalorder %s162, %s163
      %p175 = scmp.eq.s32.totalorder %s29, 15
      %p176 = por %p174, %p175
      %p178 = scmp.ne.s32.totalorder %s163, %s177
      %p179 = scmp.eq.s32.totalorder %s29, 0
      %p180 = por %p178, %p179
      %s182 = sadd.s32 %s181, 1
      %p185 = scmp.eq.s32.totalorder %s23, 15
      %p186 = scmp.ne.s32.totalorder %s181, %s183
      %p187 = scmp.eq.s32.totalorder %s23, 0
      %p188 = por %p186, %p187
      %p189 = scmp.ne.s32.totalorder %s181, %s183
      %p190 = scmp.eq.s32.totalorder %s28, 15
      %p191 = por %p189, %p190
      %p192 = scmp.ne.s32.totalorder %s183, %s184
      %p193 = scmp.eq.s32.totalorder %s28, 0
      %p194 = por %p192, %p193
      %p195 = scmp.ne.s32.totalorder %s183, %s184
      %p196 = scmp.eq.s32.totalorder %s29, 15
      %p197 = por %p195, %p196
      %p199 = scmp.ne.s32.totalorder %s184, %s198
      %p200 = scmp.eq.s32.totalorder %s29, 0
      %p201 = por %p199, %p200
      %s202 = ssub.s32 %s30, %s42
      %s203 = ssub.s32 %s31, %s38
      %s204 = sor.u32 %s202, %s203
      %p205 = scmp.eq.s32.totalorder %s204, 0
      %s207 = sadd.s32 %s206, 1
      %s208 = scalar_select %p205, %s206, %s207
      %p211 = pneg %p205
      %p212 = scmp.eq.s32.totalorder %s23, 15
      %p213 = por %p211, %p212
      %p214 = scmp.ne.s32.totalorder %s206, %s209
      %p215 = scmp.eq.s32.totalorder %s23, 0
      %p216 = por %p214, %p215
      %p217 = scmp.ne.s32.totalorder %s206, %s209
      %p218 = scmp.eq.s32.totalorder %s28, 15
      %p219 = por %p217, %p218
      %p220 = scmp.ne.s32.totalorder %s209, %s210
      %p221 = scmp.eq.s32.totalorder %s28, 0
      %p222 = por %p220, %p221
      %p223 = scmp.ne.s32.totalorder %s209, %s210
      %p224 = scmp.eq.s32.totalorder %s29, 15
      %p225 = por %p223, %p224
      %p227 = scmp.ne.s32.totalorder %s210, %s226
      %p228 = scmp.eq.s32.totalorder %s29, 0
      %p229 = por %p227, %p228
      %s230 = ssub.s32 %s30, %s42
      %p231 = scmp.eq.s32.totalorder %s230, 0
      %s233 = sadd.s32 %s232, 1
      %s234 = scalar_select %p231, %s232, %s233
      %p237 = pneg %p231
      %p238 = scmp.eq.s32.totalorder %s23, 15
      %p239 = por %p237, %p238
      %p240 = scmp.ne.s32.totalorder %s232, %s235
      %p241 = scmp.eq.s32.totalorder %s23, 0
      %p242 = por %p240, %p241
      %p243 = scmp.ne.s32.totalorder %s232, %s235
      %p244 = scmp.eq.s32.totalorder %s28, 15
      %p245 = por %p243, %p244
      %p246 = scmp.ne.s32.totalorder %s235, %s236
      %p247 = scmp.eq.s32.totalorder %s28, 0
      %p248 = por %p246, %p247
      %p249 = scmp.ne.s32.totalorder %s235, %s236
      %p250 = scmp.eq.s32.totalorder %s29, 15
      %p251 = por %p249, %p250
      %p253 = scmp.ne.s32.totalorder %s236, %s252
      %p254 = scmp.eq.s32.totalorder %s29, 0
      %p255 = por %p253, %p254
      %p256 = scmp.le.s32.totalorder 1, %s23
      %p257 = scmp.lt.s32.totalorder %s23, 17
      %p258 = pnand %p256, %p257
      %p259 = pneg %p258
      // Predicated region
      $region9: #{tpu_custom_call.1} parent=5 // pred_check
        _
      $region10: #{tpu_custom_call.1} parent=5 // pred_check_branch
        %261 = sbr.rel (%p258) target = $region12
      $region11: #{tpu_custom_call.1} parent=5 // pred_region
        %s262 = ssub.s32 %s23, 1
        // Predicated region
        $region13: #{tpu_custom_call.1} parent=11 // pred_check
          %p263 = pneg %p110
        $region14: #{tpu_custom_call.1} parent=11 // pred_check_branch
          %265 = sbr.rel (%p263) target = $region16
        $region15: #{tpu_custom_call.1} parent=11 // pred_region
          %267 = vsyncadd [#allocation7], 0
          %s268 = sshll.u32 %s2, 4
          %s269 = int_to_ptr.hbm [resolvable:$true] %s268
          %s270 = sshll.u32 [#allocation6], 4
          %s271 = int_to_ptr.vmem [resolvable:$true] %s270
          %276 = dma.hbm_to_vmem [thread:$0]  %s269, 512, %s271, [#allocation7], 128, 128, 8
        $region16: #{tpu_custom_call.1} parent=11 // pred_fallthru
          _
        // Predicated region
        $region17: #{tpu_custom_call.1} parent=11 // pred_check
          %p277 = pneg %p131
        $region18: #{tpu_custom_call.1} parent=11 // pred_check_branch
          %279 = sbr.rel (%p277) target = $region20
        $region19: #{tpu_custom_call.1} parent=11 // pred_region
          _
        $region20: #{tpu_custom_call.1} parent=11 // pred_fallthru
          _
        // Predicated region
        $region21: #{tpu_custom_call.1} parent=11 // pred_check
          %p280 = pneg %p152
        $region22: #{tpu_custom_call.1} parent=11 // pred_check_branch
          %282 = sbr.rel (%p280) target = $region24
        $region23: #{tpu_custom_call.1} parent=11 // pred_region
          %284 = vsyncadd [#allocation7], 0
          %s285 = sshll.u32 %s4, 4
          %s286 = int_to_ptr.hbm [resolvable:$true] %s285
          %s287 = sshll.u32 [#allocation8], 4
          %s288 = int_to_ptr.vmem [resolvable:$true] %s287
          %293 = dma.hbm_to_vmem [thread:$0]  %s286, 512, %s288, [#allocation7], 128, 128, 8
        $region24: #{tpu_custom_call.1} parent=11 // pred_fallthru
          _
        // Predicated region
        $region25: #{tpu_custom_call.1} parent=11 // pred_check
          %p294 = pneg %p173
        $region26: #{tpu_custom_call.1} parent=11 // pred_check_branch
          %296 = sbr.rel (%p294) target = $region28
        $region27: #{tpu_custom_call.1} parent=11 // pred_region
          %298 = vsyncadd [#allocation10], 0
          %s299 = sshll.u32 %s5, 4
          %s300 = int_to_ptr.hbm [resolvable:$true] %s299
          %s301 = sshll.u32 [#allocation9], 4
          %s302 = int_to_ptr.vmem [resolvable:$true] %s301
          %307 = dma.hbm_to_vmem [thread:$0]  %s300, 1024, %s302, [#allocation10], 128, 128, 8
        $region28: #{tpu_custom_call.1} parent=11 // pred_fallthru
          _
        // Predicated region
        $region29: #{tpu_custom_call.1} parent=11 // pred_check
          %p308 = pneg %p194
        $region30: #{tpu_custom_call.1} parent=11 // pred_check_branch
          %310 = sbr.rel (%p308) target = $region32
        $region31: #{tpu_custom_call.1} parent=11 // pred_region
          _
        $region32: #{tpu_custom_call.1} parent=11 // pred_fallthru
          _
      $region12: #{tpu_custom_call.1} parent=5 // pred_fallthru
        _
      %p311 = scmp.lt.s32.totalorder %s23, 16
      // Predicated region
      $region33: #{tpu_custom_call.1} parent=5 // pred_check
        %p312 = pneg %p311
      $region34: #{tpu_custom_call.1} parent=5 // pred_check_branch
        %314 = sbr.rel (%p312) target = $region36
      $region35: #{tpu_custom_call.1} parent=5 // pred_region
        // Predicated region
        $region37: #{tpu_custom_call.1} parent=35 // pred_check
          %p315 = pneg %p57
        $region38: #{tpu_custom_call.1} parent=35 // pred_check_branch
          %317 = sbr.rel (%p315) target = $region40
        $region39: #{tpu_custom_call.1} parent=35 // pred_region
          %s318 = sand.u32 %s47, 1
          %s319 = scalar_lea.sflag [#allocation4], %s318
          %s320 = sand.u32 %s47, 1
          %s321 = scalar_lea.vmem [#allocation3], %s320
          %323 = vsyncadd %s319, 0
          %s324 = smul.addr %s30, 8
          %s325 = sadd.s32 %s31, %s324
          %s326 = scalar_lea.hbm %s0, %s325
          %s328 = sshll.u32 %s326, 4
          %s329 = int_to_ptr.hbm [resolvable:$true] %s328
          %s330 = sshll.u32 %s321, 4
          %s331 = int_to_ptr.vmem [resolvable:$true] %s330
          %333 = dma.hbm_to_vmem [thread:$0]  %s329, 16, %s331, %s319
        $region40: #{tpu_custom_call.1} parent=35 // pred_fallthru
          _
        // Predicated region
        $region41: #{tpu_custom_call.1} parent=35 // pred_check
          %p334 = pneg %p83
        $region42: #{tpu_custom_call.1} parent=35 // pred_check_branch
          %336 = sbr.rel (%p334) target = $region44
        $region43: #{tpu_custom_call.1} parent=35 // pred_region
          %p337 = scmp.lt.s32.totalorder %s30, 1
          %s338 = scalar_select %p337, %s30, 1
          %s339 = smul.addr %s338, 4
          %s340 = scalar_lea.vmem %s1, %s339
        $region44: #{tpu_custom_call.1} parent=35 // pred_fallthru
          _
      $region36: #{tpu_custom_call.1} parent=5 // pred_fallthru
        _
      %p341 = scmp.le.s32.totalorder 1, %s23
      %p342 = scmp.lt.s32.totalorder %s23, 17
      %p343 = pnand %p341, %p342
      %p344 = pneg %p343
      // Predicated region
      $region45: #{tpu_custom_call.1} parent=5 // pred_check
        _
      $region46: #{tpu_custom_call.1} parent=5 // pred_check_branch
        %346 = sbr.rel (%p343) target = $region48
      $region47: #{tpu_custom_call.1} parent=5 // pred_region
        %s347 = ssub.s32 %s23, 1
        %s348 = sand.u32 %s50, 1
        %s349 = scalar_lea.sflag [#allocation4], %s348
        %s350 = sand.u32 %s50, 1
        %s351 = scalar_lea.vmem [#allocation3], %s350
        // Predicated region
        $region49: #{tpu_custom_call.1} parent=47 // pred_check
          %p352 = pneg %p63
        $region50: #{tpu_custom_call.1} parent=47 // pred_check_branch
          %354 = sbr.rel (%p352) target = $region52
        $region51: #{tpu_custom_call.1} parent=47 // pred_region
          %356 = dma.done %s349, 16
        $region52: #{tpu_custom_call.1} parent=47 // pred_fallthru
          _
        // Predicated region
        $region53: #{tpu_custom_call.1} parent=47 // pred_check
          %p357 = pneg %p110
        $region54: #{tpu_custom_call.1} parent=47 // pred_check_branch
          %359 = sbr.rel (%p357) target = $region56
        $region55: #{tpu_custom_call.1} parent=47 // pred_region
          %361 = dma.done [#allocation7], 512
        $region56: #{tpu_custom_call.1} parent=47 // pred_fallthru
          _
        // Predicated region
        $region57: #{tpu_custom_call.1} parent=47 // pred_check
          %p362 = pneg %p152
        $region58: #{tpu_custom_call.1} parent=47 // pred_check_branch
          %364 = sbr.rel (%p362) target = $region60
        $region59: #{tpu_custom_call.1} parent=47 // pred_region
          %366 = dma.done [#allocation7], 512
        $region60: #{tpu_custom_call.1} parent=47 // pred_fallthru
          _
        // Predicated region
        $region61: #{tpu_custom_call.1} parent=47 // pred_check
          %p367 = pneg %p173
        $region62: #{tpu_custom_call.1} parent=47 // pred_check_branch
          %369 = sbr.rel (%p367) target = $region64
        $region63: #{tpu_custom_call.1} parent=47 // pred_region
          %371 = dma.done [#allocation10], 1024
        $region64: #{tpu_custom_call.1} parent=47 // pred_fallthru
          _
        %s372 = sand.u32 %s50, 1
        %s373 = scalar_lea.sflag [#allocation4], %s372
        %s374 = sand.u32 %s50, 1
        %s375 = scalar_lea.vmem [#allocation3], %s374
        %p376 = pneg %p63
        %p377 = pneg %p60
        %p378 = scmp.lt.s32.totalorder %s32, 1
        %s379 = scalar_select %p378, %s32, 1
        %s380 = smul.addr %s379, 4
        %s381 = scalar_lea.vmem %s1, %s380
        %p382 = pneg %p89
        %p383 = pneg %p86
        %p384 = pneg %p110
        %p385 = pneg %p107
        %p386 = pneg %p131
        %p387 = pneg %p128
        %p388 = pneg %p152
        %p389 = pneg %p149
        %p390 = pneg %p173
        %p391 = pneg %p170
        %p392 = pneg %p194
        %p393 = pneg %p191
        %p394 = pneg %p222
        %p395 = pneg %p219
        %s396 = sand.u32 %s209, 1
        %s397 = scalar_lea.sflag [#allocation5], %s396
        %s398 = sand.u32 %s209, 1
        %s399 = scalar_lea.vmem [#allocation11], %s398
        %p400 = pneg %p248
        %p401 = pneg %p245
        %p402 = scmp.lt.s32.totalorder %s32, 1
        %s403 = scalar_select %p402, %s32, 1
        %s404 = smul.addr %s403, 4
        %s405 = scalar_lea.vmem %s8, %s404
        %p406 = scmp.lt.s32.totalorder %s32, 1
        %s407 = scalar_select %p406, %s32, 1
        %s408 = smul.addr %s407, 4
        %s409 = scalar_lea.vmem %s1, %s408
        %p410 = scmp.lt.s32.totalorder %s32, 1
        %s411 = scalar_select %p410, %s32, 1
        %s412 = smul.addr %s411, 4
        %s413 = scalar_lea.vmem %s8, %s412
        %p414 = scmp.eq.s32.totalorder %s33, 0
        // Predicated region
        $region65: #{tpu_custom_call.1} parent=47 // pred_check
          %p415 = pneg %p414
        $region66: #{tpu_custom_call.1} parent=47 // pred_check_branch
          %417 = sbr.rel (%p415) target = $region68
        $region67: #{tpu_custom_call.1} parent=47 // pred_region
          %v418 = vld [vmem:[%s409] sm:$0x7]
          %vm419 = vcmask 256000
          %420 = vst.msk [vmem:[#allocation2] sm:$0x7] %vm419, %v418
        $region68: #{tpu_custom_call.1} parent=47 // pred_fallthru
          _
        %v421 = vld [vmem:[%s351] sm:$0x1]
        %v422 = vld [vmem:[#allocation2] sm:$0x7]
        %v423 = vld [vmem:[#allocation8] sm:$0xff]
        %v424 = vld [vmem:[#allocation8 + $0x8] sm:$0xff]
        %v425 = vld [vmem:[#allocation8 + $0x10] sm:$0xff]
        %v426 = vld [vmem:[#allocation8 + $0x18] sm:$0xff]
        %v427 = vld [vmem:[%s6] sm:$0x1]
        %v429 = vperm.slane %v427, 0
        %vm431 = vcmask 261120
        %v433 = vsel %vm431, %v422, 0
        %435 = vmatpush.msra.mxu0 0.0
        %436 = vmatpush.msra.mxu0 0.0
        %437 = vmatpush.msra.mxu0 0.0
        %438 = vmatpush.msra.mxu0 0.0
        %439 = vmatpush.msra.mxu0 0.0
        %440 = vmatpush.msra.mxu0 0.0
        %441 = vmatpush.msra.mxu0 0.0
        %442 = vmatpush.msra.mxu0 0.0
        %443 = vmatpush.msra.mxu0 0.0
        %444 = vmatpush.msra.mxu0 0.0
        %445 = vmatpush.msra.mxu0 0.0
        %446 = vmatpush.msra.mxu0 0.0
        %447 = vmatpush.msra.mxu0 %v426
        %448 = vmatpush.msra.mxu0 %v425
        %449 = vmatpush.msra.mxu0 %v424
        %450 = vmatpush.msra.mxu0 %v423
        %451 = vmatmul.f32.gmra.mxu0 %v433
        %v452 = vpop.f32.mrf.mxu0
        %v453 = vadd.f32 %v429, %v452
        %454 = vdwg.mxu0
        %v455 = vld [vmem:[#allocation6] sm:$0xff]
        %v456 = vld [vmem:[#allocation6 + $0x8] sm:$0xff]
        %v457 = vld [vmem:[#allocation6 + $0x10] sm:$0xff]
        %v458 = vld [vmem:[#allocation6 + $0x18] sm:$0xff]
        %v459 = vld [vmem:[%s3] sm:$0x1]
        %v461 = vsel %vm431, %v421, 0
        %463 = vmatpush.msra.mxu0 0.0
        %464 = vmatpush.msra.mxu0 0.0
        %465 = vmatpush.msra.mxu0 0.0
        %466 = vmatpush.msra.mxu0 0.0
        %467 = vmatpush.msra.mxu0 0.0
        %468 = vmatpush.msra.mxu0 0.0
        %469 = vmatpush.msra.mxu0 0.0
        %470 = vmatpush.msra.mxu0 0.0
        %471 = vmatpush.msra.mxu0 0.0
        %472 = vmatpush.msra.mxu0 0.0
        %473 = vmatpush.msra.mxu0 0.0
        %474 = vmatpush.msra.mxu0 0.0
        %475 = vmatpush.msra.mxu0 %v458
        %476 = vmatpush.msra.mxu0 %v457
        %477 = vmatpush.msra.mxu0 %v456
        %478 = vmatpush.msra.mxu0 %v455
        %479 = vmatmul.f32.gmra.mxu0 %v461
        %v480 = vpop.f32.mrf.mxu0
        %v481 = vadd.f32 %v459, %v480
        %482 = vdwg.mxu0
        %v483 = vadd.f32 %v453, %v481
        %v484 = vtanh.pop %v483
        %vm485 = vcmask 253952
        %486 = vst.msk [vmem:[#allocation2] sm:$0x1] %vm485, %v484
        %v488 = vrot.slane %v481, 7
        %v490 = vadd.f32 %v453, %v488
        %v491 = vtanh.pop %v490
        %vm492 = vcmask 254977
        %493 = vst.msk [vmem:[#allocation2] sm:$0x2] %vm492, %v491
        %v494 = vrot.slane %v481, 6
        %v496 = vadd.f32 %v453, %v494
        %v497 = vtanh.pop %v496
        %vm498 = vcmask 256002
        %499 = vst.msk [vmem:[#allocation2] sm:$0x4] %vm498, %v497
        %v500 = vld [vmem:[#allocation2] sm:$0x7]
        %v501 = vld [vmem:[#allocation9] sm:$0xff]
        %v502 = vld [vmem:[#allocation9 + $0x8] sm:$0xff]
        %v503 = vld [vmem:[#allocation9 + $0x10] sm:$0xff]
        %v504 = vld [vmem:[#allocation9 + $0x18] sm:$0xff]
        %s505 = scalar_lea.vmem %s6, 1
        %v506 = vld [vmem:[%s505] sm:$0x1]
        %v508 = vperm.slane %v506, 0
        %v511 = vsel %vm431, %v500, 0
        %513 = vmatpush.msra.mxu0 0.0
        %514 = vmatpush.msra.mxu0 0.0
        %515 = vmatpush.msra.mxu0 0.0
        %516 = vmatpush.msra.mxu0 0.0
        %517 = vmatpush.msra.mxu0 0.0
        %518 = vmatpush.msra.mxu0 0.0
        %519 = vmatpush.msra.mxu0 0.0
        %520 = vmatpush.msra.mxu0 0.0
        %521 = vmatpush.msra.mxu0 0.0
        %522 = vmatpush.msra.mxu0 0.0
        %523 = vmatpush.msra.mxu0 0.0
        %524 = vmatpush.msra.mxu0 0.0
        %525 = vmatpush.msra.mxu0 %v504
        %526 = vmatpush.msra.mxu0 %v503
        %527 = vmatpush.msra.mxu0 %v502
        %528 = vmatpush.msra.mxu0 %v501
        %529 = vmatmul.f32.gmra.mxu0 %v511
        %v530 = vpop.f32.mrf.mxu0
        %v531 = vadd.f32 %v508, %v530
        %532 = vdwg.mxu0
        %v533 = vtanh.pop %v531
        %s534 = scalar_lea.vmem [#allocation9], 32
        %v535 = vld [vmem:[%s534] sm:$0xff]
        %v536 = vld [vmem:[%s534 + $0x8] sm:$0xff]
        %v537 = vld [vmem:[%s534 + $0x10] sm:$0xff]
        %v538 = vld [vmem:[%s534 + $0x18] sm:$0xff]
        %s539 = scalar_lea.vmem %s6, 2
        %v540 = vld [vmem:[%s539] sm:$0x1]
        %v542 = vperm.slane %v540, 0
        %v545 = vsel %vm431, %v533, 0
        %547 = vmatpush.msra.mxu0 0.0
        %548 = vmatpush.msra.mxu0 0.0
        %549 = vmatpush.msra.mxu0 0.0
        %550 = vmatpush.msra.mxu0 0.0
        %551 = vmatpush.msra.mxu0 0.0
        %552 = vmatpush.msra.mxu0 0.0
        %553 = vmatpush.msra.mxu0 0.0
        %554 = vmatpush.msra.mxu0 0.0
        %555 = vmatpush.msra.mxu0 0.0
        %556 = vmatpush.msra.mxu0 0.0
        %557 = vmatpush.msra.mxu0 0.0
        %558 = vmatpush.msra.mxu0 0.0
        %559 = vmatpush.msra.mxu0 %v538
        %560 = vmatpush.msra.mxu0 %v537
        %561 = vmatpush.msra.mxu0 %v536
        %562 = vmatpush.msra.mxu0 %v535
        %563 = vmatmul.f32.gmra.mxu0 %v545
        %v564 = vpop.f32.mrf.mxu0
        %v565 = vadd.f32 %v542, %v564
        %566 = vdwg.mxu0
        %v567 = vtanh.pop %v565
        %vm568 = vcmask 256000
        %569 = vst.msk [vmem:[#allocation2] sm:$0x7] %vm568, %v567
        %570 = vst.msk [vmem:[%s399 - $0x2] sm:$0x4] %vm498, %v567
        %p571 = scmp.eq.s32.totalorder %s33, 7
        // Predicated region
        $region69: #{tpu_custom_call.1} parent=47 // pred_check
          %p572 = pneg %p571
        $region70: #{tpu_custom_call.1} parent=47 // pred_check_branch
          %574 = sbr.rel (%p572) target = $region72
        $region71: #{tpu_custom_call.1} parent=47 // pred_region
          %575 = vst.msk [vmem:[%s413] sm:$0x7] %vm568, %v567
        $region72: #{tpu_custom_call.1} parent=47 // pred_fallthru
          _
        %s576 = sand.u32 %s209, 1
        %s577 = scalar_lea.sflag [#allocation5], %s576
        %s578 = sand.u32 %s209, 1
        %s579 = scalar_lea.vmem [#allocation11], %s578
        %p580 = scmp.lt.s32.totalorder %s32, 1
        %s581 = scalar_select %p580, %s32, 1
        %s582 = smul.addr %s581, 4
        %s583 = scalar_lea.vmem %s8, %s582
        // Predicated region
        $region73: #{tpu_custom_call.1} parent=47 // pred_check
          %p584 = pneg %p219
        $region74: #{tpu_custom_call.1} parent=47 // pred_check_branch
          %586 = sbr.rel (%p584) target = $region76
        $region75: #{tpu_custom_call.1} parent=47 // pred_region
          %588 = vsyncadd %s577, 0
          %s589 = smul.addr %s32, 8
          %s590 = sadd.s32 %s33, %s589
          %s591 = scalar_lea.hbm %s7, %s590
          %s593 = sshll.u32 %s579, 4
          %s594 = int_to_ptr.vmem [resolvable:$true] %s593
          %s595 = sshll.u32 %s591, 4
          %s596 = int_to_ptr.hbm [resolvable:$true] %s595
          %598 = dma.vmem_to_hbm [thread:$0]  %s594, 16, %s596, %s577
        $region76: #{tpu_custom_call.1} parent=47 // pred_fallthru
          _
        // Predicated region
        $region77: #{tpu_custom_call.1} parent=47 // pred_check
          %p599 = pneg %p245
        $region78: #{tpu_custom_call.1} parent=47 // pred_check_branch
          %601 = sbr.rel (%p599) target = $region80
        $region79: #{tpu_custom_call.1} parent=47 // pred_region
          _
        $region80: #{tpu_custom_call.1} parent=47 // pred_fallthru
          _
      $region48: #{tpu_custom_call.1} parent=5 // pred_fallthru
        _
      %p602 = scmp.le.s32.totalorder 2, %s23
      // Predicated region
      $region81: #{tpu_custom_call.1} parent=5 // pred_check
        %p603 = pneg %p602
      $region82: #{tpu_custom_call.1} parent=5 // pred_check_branch
        %605 = sbr.rel (%p603) target = $region84
      $region83: #{tpu_custom_call.1} parent=5 // pred_region
        %s606 = ssub.s32 %s23, 2
        // Predicated region
        $region85: #{tpu_custom_call.1} parent=83 // pred_check
          %p607 = pneg %p225
        $region86: #{tpu_custom_call.1} parent=83 // pred_check_branch
          %609 = sbr.rel (%p607) target = $region88
        $region87: #{tpu_custom_call.1} parent=83 // pred_region
          %s610 = sand.u32 %s210, 1
          %s611 = scalar_lea.sflag [#allocation5], %s610
          %s612 = sand.u32 %s210, 1
          %s613 = scalar_lea.vmem [#allocation11], %s612
          %615 = dma.done %s611, 16
        $region88: #{tpu_custom_call.1} parent=83 // pred_fallthru
          _
        // Predicated region
        $region89: #{tpu_custom_call.1} parent=83 // pred_check
          %p616 = pneg %p251
        $region90: #{tpu_custom_call.1} parent=83 // pred_check_branch
          %618 = sbr.rel (%p616) target = $region92
        $region91: #{tpu_custom_call.1} parent=83 // pred_region
          %p619 = scmp.lt.s32.totalorder %s34, 1
          %s620 = scalar_select %p619, %s34, 1
          %s621 = smul.addr %s620, 4
          %s622 = scalar_lea.vmem %s8, %s621
        $region92: #{tpu_custom_call.1} parent=83 // pred_fallthru
          _
      $region84: #{tpu_custom_call.1} parent=5 // pred_fallthru
        _
    $region6: #{tpu_custom_call.1} parent=1 // loop_footer
      %s27 = sadd.s32 1, %s23
    $region7: #{tpu_custom_call.1} parent=1 // loop_footer_branch
      %22 = sbr.rel target = $region3
    $region8: #{tpu_custom_call.1} parent=1 // loop_exit
      _
    %623 = vsyncpa [#allocation4], 1
    %s624 = scalar_lea.sflag [#allocation4], 1
    %625 = vsyncpa %s624, 1
    %626 = vsyncpa [#allocation7], 1
    %627 = vsyncpa [#allocation10], 1
    %628 = vsyncpa [#allocation5], 1
    %s629 = scalar_lea.sflag [#allocation5], 1
    %630 = vsyncpa %s629, 1

</llo_original>
